<compile_context>
chip_gen: v7x
topology: tpu7x:2x2x1
jax: 0.10.0
libtpu: 0.0.40
codegen_flags: <defaults>
</compile_context>

<pallas_src>
import functools

import jax
import jax.numpy as jnp
from jax.experimental import pallas as pl
from jax.experimental.pallas import tpu as pltpu


def _adjust_block_kernel(p1_ref, w1_ref, w2_ref, s2_ref, b2_ref,
                         o_ref, mid_ref, *, Ho, Wo):
    """One batch element of AdjustBlock (conv1 + bn2 + relu + conv2).

    p1_ref : (Ho*Wo, 9*Cin)   bf16  im2col patches of relu(bn1(x))
    w1_ref : (9*Cin, Cout)    bf16  conv1 weight, rows ordered (kh, kw, cin)
    w2_ref : (9*Cout, Cout)   bf16  conv2 weight, rows ordered (kh, kw, c)
    s2_ref : (1, Cout)        f32   bn2 scale  (gamma / sqrt(var + eps))
    b2_ref : (1, Cout)        f32   bn2 bias   (beta - mean * scale)
    o_ref  : (Ho*Wo, Cout)    f32   block output
    mid_ref: (Ho+2, Wo+2, Cout) f32 VMEM scratch (zero-padded intermediate)
    """
    Cout = o_ref.shape[-1]

    # ---- conv1: single im2col matmul on the MXU (bf16 in, f32 accumulate) ----
    y1 = jnp.dot(p1_ref[...], w1_ref[...], preferred_element_type=jnp.float32)

    # ---- fused BN2 (inference affine) + ReLU, f32 elementwise ----
    y1 = jnp.maximum(y1 * s2_ref[...] + b2_ref[...], 0.0)

    # ---- zero-padded intermediate kept in VMEM (padding=1 for conv2) ----
    mid_ref[...] = jnp.zeros_like(mid_ref)
    mid_ref[1:Ho + 1, 1:Wo + 1, :] = y1.reshape(Ho, Wo, Cout)

    # ---- conv2: 9 contiguous (unit-stride) taps -> one (Ho*Wo, 9*Cout)
    #      patch matrix -> a single MXU matmul ----
    taps = [mid_ref[kh:kh + Ho, kw:kw + Wo, :].reshape(Ho * Wo, Cout)
            for kh in range(3) for kw in range(3)]
    p2 = jnp.concatenate(taps, axis=-1).astype(w2_ref.dtype)   # (Ho*Wo, 9*Cout)
    y2 = jnp.dot(p2, w2_ref[...], preferred_element_type=jnp.float32)

    o_ref[...] = y2.astype(o_ref.dtype)


def adjust_block_forward(x_nchw, params, *, stride=2, eps=1e-5):
    """Equivalent of AdjustBlock.forward (BatchNorm in inference mode)."""
    w1 = params["conv1_w"]            # (Cout, Cin, 3, 3)  OIHW
    w2 = params["conv2_w"]            # (Cout, Cout, 3, 3) OIHW
    g1, b1, m1, v1 = params["bn1_g"], params["bn1_b"], params["bn1_m"], params["bn1_v"]
    g2, b2, m2, v2 = params["bn2_g"], params["bn2_b"], params["bn2_m"], params["bn2_v"]

    N, Cin, H, W = x_nchw.shape
    Cout = w1.shape[0]
    Ho = (H + 2 - 3) // stride + 1
    Wo = (W + 2 - 3) // stride + 1

    # --- layout + BN1 + ReLU + conv1 im2col (plain JAX glue, fused by XLA) ---
    x = jnp.transpose(x_nchw, (0, 2, 3, 1)).astype(jnp.float32)      # NHWC
    s1 = g1 / jnp.sqrt(v1 + eps)
    o1 = b1 - m1 * s1
    y = jnp.maximum(x * s1 + o1, 0.0)                                # relu(bn1(x))
    # BN1+ReLU must happen before zero-padding (pad value is 0 AFTER the relu).
    yp = jnp.pad(y, ((0, 0), (1, 1), (1, 1), (0, 0)))

    taps = [yp[:, kh:kh + stride * Ho:stride, kw:kw + stride * Wo:stride, :]
            for kh in range(3) for kw in range(3)]
    p1 = jnp.concatenate(taps, axis=-1).reshape(N, Ho * Wo, 9 * Cin)
    p1 = p1.astype(jnp.bfloat16)

    # Flat, MXU-friendly weights; row order (kh, kw, c) matches the patches.
    w1f = jnp.transpose(w1, (2, 3, 1, 0)).reshape(9 * Cin, Cout).astype(jnp.bfloat16)
    w2f = jnp.transpose(w2, (2, 3, 1, 0)).reshape(9 * Cout, Cout).astype(jnp.bfloat16)

    scale2 = g2 / jnp.sqrt(v2 + eps)
    s2 = scale2.reshape(1, Cout).astype(jnp.float32)
    o2 = (b2 - m2 * scale2).reshape(1, Cout).astype(jnp.float32)

    out_flat = pl.pallas_call(
        functools.partial(_adjust_block_kernel, Ho=Ho, Wo=Wo),
        out_shape=jax.ShapeDtypeStruct((N, Ho * Wo, Cout), jnp.float32),
        grid=(N,),
        in_specs=[
            pl.BlockSpec((None, Ho * Wo, 9 * Cin), lambda n: (n, 0, 0)),
            pl.BlockSpec((9 * Cin, Cout), lambda n: (0, 0)),
            pl.BlockSpec((9 * Cout, Cout), lambda n: (0, 0)),
            pl.BlockSpec((1, Cout), lambda n: (0, 0)),
            pl.BlockSpec((1, Cout), lambda n: (0, 0)),
        ],
        out_specs=pl.BlockSpec((None, Ho * Wo, Cout), lambda n: (n, 0, 0)),
        scratch_shapes=[pltpu.VMEM((Ho + 2, Wo + 2, Cout), jnp.float32)],
        compiler_params=pltpu.CompilerParams(
            # size-N parallel axis -> both TensorCores on v7x; trivial on v5e/v6e.
            dimension_semantics=("parallel",),
        ),
    )(p1, w1f, w2f, s2, o2)

    out = out_flat.reshape(N, Ho, Wo, Cout)
    return jnp.transpose(out, (0, 3, 1, 2))                          # NCHW


def _reference_forward(x_nchw, params, *, stride=2, eps=1e-5):
    """Pure-JAX f32 reference with the same (inference-mode BN) semantics."""
    w1, w2 = params["conv1_w"], params["conv2_w"]
    g1, b1, m1, v1 = params["bn1_g"], params["bn1_b"], params["bn1_m"], params["bn1_v"]
    g2, b2, m2, v2 = params["bn2_g"], params["bn2_b"], params["bn2_m"], params["bn2_v"]

    s1 = g1 / jnp.sqrt(v1 + eps)
    o1 = b1 - m1 * s1
    y = jnp.maximum(x_nchw * s1[None, :, None, None] + o1[None, :, None, None], 0.0)
    h = jax.lax.conv_general_dilated(
        y, w1, (stride, stride), ((1, 1), (1, 1)),
        dimension_numbers=("NCHW", "OIHW", "NCHW"))
    s2 = g2 / jnp.sqrt(v2 + eps)
    o2 = b2 - m2 * s2
    z = jnp.maximum(h * s2[None, :, None, None] + o2[None, :, None, None], 0.0)
    return jax.lax.conv_general_dilated(
        z, w2, (1, 1), ((1, 1), (1, 1)),
        dimension_numbers=("NCHW", "OIHW", "NCHW"))


if __name__ == "__main__":
    key = jax.random.PRNGKey(0)
    ks = jax.random.split(key, 12)

    # Small shapes consistent with the module: in_planes=4, planes=8, stride=2.
    N, Cin, H, W = 2, 4, 16, 16
    Cout, stride = 8, 2

    x = jax.random.normal(ks[0], (N, Cin, H, W), dtype=jnp.float32)
    params = dict(
        conv1_w=jax.random.normal(ks[1], (Cout, Cin, 3, 3), jnp.float32) * 0.1,
        conv2_w=jax.random.normal(ks[2], (Cout, Cout, 3, 3), jnp.float32) * 0.1,
        bn1_g=1.0 + 0.1 * jax.random.normal(ks[3], (Cin,), jnp.float32),
        bn1_b=0.1 * jax.random.normal(ks[4], (Cin,), jnp.float32),
        bn1_m=0.1 * jax.random.normal(ks[5], (Cin,), jnp.float32),
        bn1_v=1.0 + 0.1 * jax.random.uniform(ks[6], (Cin,), jnp.float32),
        bn2_g=1.0 + 0.1 * jax.random.normal(ks[7], (Cout,), jnp.float32),
        bn2_b=0.1 * jax.random.normal(ks[8], (Cout,), jnp.float32),
        bn2_m=0.1 * jax.random.normal(ks[9], (Cout,), jnp.float32),
        bn2_v=1.0 + 0.1 * jax.random.uniform(ks[10], (Cout,), jnp.float32),
    )

    fwd = jax.jit(functools.partial(adjust_block_forward, stride=stride))
    out = jax.block_until_ready(fwd(x, params))

    ref = _reference_forward(x, params, stride=stride)
    assert out.shape == ref.shape == (N, Cout, H // stride, W // stride)
    max_err = float(jnp.max(jnp.abs(out - ref)))
    # bf16 matmul operands with f32 accumulation -> loose-ish tolerance.
    assert jnp.allclose(out, ref, atol=5e-2, rtol=5e-2), f"max abs err {max_err}"

    print("KERNEL_OK")
</pallas_src>

<mosaic_0001>
module attributes {stable_mosaic.version = 11 : i64} {
  func.func @_adjust_block_kernel(%arg0: i32, %arg1: memref<1x64x36xbf16, #tpu.memory_space<vmem>>, %arg2: memref<36x8xbf16, #tpu.memory_space<vmem>>, %arg3: memref<72x8xbf16, #tpu.memory_space<vmem>>, %arg4: memref<1x8xf32, #tpu.memory_space<vmem>>, %arg5: memref<1x8xf32, #tpu.memory_space<vmem>>, %arg6: memref<1x64x8xf32, #tpu.memory_space<vmem>>, %arg7: memref<10x10x8xf32, #tpu.memory_space<vmem>>) attributes {dimension_semantics = [#tpu.dimension_semantics<parallel>], iteration_bounds = array<i64: 2>, scalar_prefetch = 0 : i64, scratch_operands = 1 : i64, tpu.core_type = #tpu.core_type<tc>, window_params = [{transform_indices = @transform_0, window_bounds = array<i64: 1, 64, 36>}, {pipeline_mode = #tpu.pipeline_mode<synchronous>, transform_indices = @transform_1, window_bounds = array<i64: 36, 8>}, {pipeline_mode = #tpu.pipeline_mode<synchronous>, transform_indices = @transform_2, window_bounds = array<i64: 72, 8>}, {pipeline_mode = #tpu.pipeline_mode<synchronous>, transform_indices = @transform_3, window_bounds = array<i64: 1, 8>}, {pipeline_mode = #tpu.pipeline_mode<synchronous>, transform_indices = @transform_4, window_bounds = array<i64: 1, 8>}, {transform_indices = @transform_5, window_bounds = array<i64: 1, 64, 8>}]} {
    %c0 = arith.constant 0 : index
    %c0_0 = arith.constant 0 : index
    %c0_1 = arith.constant 0 : index
    %0 = vector.load %arg1[%c0, %c0_0, %c0_1] : memref<1x64x36xbf16, #tpu.memory_space<vmem>>, vector<1x64x36xbf16>
    %1 = vector.shape_cast %0 : vector<1x64x36xbf16> to vector<64x36xbf16>
    %c0_2 = arith.constant 0 : index
    %c0_3 = arith.constant 0 : index
    %2 = vector.load %arg2[%c0_2, %c0_3] : memref<36x8xbf16, #tpu.memory_space<vmem>>, vector<36x8xbf16>
    %cst = arith.constant dense<0.000000e+00> : vector<64x8xf32>
    %3 = tpu.matmul %1, %2, %cst {dimension_numbers = #tpu.dot_dimension_numbers<[1], [0], [0], [1], [0, 0, 1, 1], [], []>} : vector<64x36xbf16>, vector<36x8xbf16>, vector<64x8xf32> -> vector<64x8xf32>
    %c0_4 = arith.constant 0 : index
    %c0_5 = arith.constant 0 : index
    %4 = vector.load %arg4[%c0_4, %c0_5] : memref<1x8xf32, #tpu.memory_space<vmem>>, vector<1x8xf32>
    %5 = vector.broadcast %4 : vector<1x8xf32> to vector<64x8xf32>
    %6 = arith.mulf %3, %5 : vector<64x8xf32>
    %c0_6 = arith.constant 0 : index
    %c0_7 = arith.constant 0 : index
    %7 = vector.load %arg5[%c0_6, %c0_7] : memref<1x8xf32, #tpu.memory_space<vmem>>, vector<1x8xf32>
    %8 = vector.broadcast %7 : vector<1x8xf32> to vector<64x8xf32>
    %9 = arith.addf %6, %8 : vector<64x8xf32>
    %cst_8 = arith.constant 0.000000e+00 : f32
    %10 = vector.broadcast %cst_8 : f32 to vector<64x8xf32>
    %11 = arith.maximumf %9, %10 : vector<64x8xf32>
    %cst_9 = arith.constant 0.000000e+00 : f32
    %12 = vector.broadcast %cst_9 : f32 to vector<10x10x8xf32>
    %c0_10 = arith.constant 0 : index
    %c0_11 = arith.constant 0 : index
    %c0_12 = arith.constant 0 : index
    %13 = vector.load %arg7[%c0_10, %c0_11, %c0_12] : memref<10x10x8xf32, #tpu.memory_space<vmem>>, vector<10x10x8xf32>
    tpu.vector_store %arg7[%c0_10, %c0_11, %c0_12], %12 {strides = array<i32>} : memref<10x10x8xf32, #tpu.memory_space<vmem>>, vector<10x10x8xf32>,
    %14 = vector.shape_cast %11 : vector<64x8xf32> to vector<8x8x8xf32>
    %c1 = arith.constant 1 : index
    %c1_13 = arith.constant 1 : index
    %c0_14 = arith.constant 0 : index
    %15 = vector.load %arg7[%c1, %c1_13, %c0_14] : memref<10x10x8xf32, #tpu.memory_space<vmem>>, vector<8x8x8xf32>
    tpu.vector_store %arg7[%c1, %c1_13, %c0_14], %14 {strides = array<i32>} : memref<10x10x8xf32, #tpu.memory_space<vmem>>, vector<8x8x8xf32>,
    %c0_15 = arith.constant 0 : index
    %c0_16 = arith.constant 0 : index
    %c0_17 = arith.constant 0 : index
    %16 = vector.load %arg7[%c0_15, %c0_16, %c0_17] : memref<10x10x8xf32, #tpu.memory_space<vmem>>, vector<8x8x8xf32>
    %17 = vector.shape_cast %16 : vector<8x8x8xf32> to vector<64x8xf32>
    %c0_18 = arith.constant 0 : index
    %c1_19 = arith.constant 1 : index
    %c0_20 = arith.constant 0 : index
    %18 = vector.load %arg7[%c0_18, %c1_19, %c0_20] : memref<10x10x8xf32, #tpu.memory_space<vmem>>, vector<8x8x8xf32>
    %19 = vector.shape_cast %18 : vector<8x8x8xf32> to vector<64x8xf32>
    %c0_21 = arith.constant 0 : index
    %c2 = arith.constant 2 : index
    %c0_22 = arith.constant 0 : index
    %20 = vector.load %arg7[%c0_21, %c2, %c0_22] : memref<10x10x8xf32, #tpu.memory_space<vmem>>, vector<8x8x8xf32>
    %21 = vector.shape_cast %20 : vector<8x8x8xf32> to vector<64x8xf32>
    %c1_23 = arith.constant 1 : index
    %c0_24 = arith.constant 0 : index
    %c0_25 = arith.constant 0 : index
    %22 = vector.load %arg7[%c1_23, %c0_24, %c0_25] : memref<10x10x8xf32, #tpu.memory_space<vmem>>, vector<8x8x8xf32>
    %23 = vector.shape_cast %22 : vector<8x8x8xf32> to vector<64x8xf32>
    %c1_26 = arith.constant 1 : index
    %c1_27 = arith.constant 1 : index
    %c0_28 = arith.constant 0 : index
    %24 = vector.load %arg7[%c1_26, %c1_27, %c0_28] : memref<10x10x8xf32, #tpu.memory_space<vmem>>, vector<8x8x8xf32>
    %25 = vector.shape_cast %24 : vector<8x8x8xf32> to vector<64x8xf32>
    %c1_29 = arith.constant 1 : index
    %c2_30 = arith.constant 2 : index
    %c0_31 = arith.constant 0 : index
    %26 = vector.load %arg7[%c1_29, %c2_30, %c0_31] : memref<10x10x8xf32, #tpu.memory_space<vmem>>, vector<8x8x8xf32>
    %27 = vector.shape_cast %26 : vector<8x8x8xf32> to vector<64x8xf32>
    %c2_32 = arith.constant 2 : index
    %c0_33 = arith.constant 0 : index
    %c0_34 = arith.constant 0 : index
    %28 = vector.load %arg7[%c2_32, %c0_33, %c0_34] : memref<10x10x8xf32, #tpu.memory_space<vmem>>, vector<8x8x8xf32>
    %29 = vector.shape_cast %28 : vector<8x8x8xf32> to vector<64x8xf32>
    %c2_35 = arith.constant 2 : index
    %c1_36 = arith.constant 1 : index
    %c0_37 = arith.constant 0 : index
    %30 = vector.load %arg7[%c2_35, %c1_36, %c0_37] : memref<10x10x8xf32, #tpu.memory_space<vmem>>, vector<8x8x8xf32>
    %31 = vector.shape_cast %30 : vector<8x8x8xf32> to vector<64x8xf32>
    %c2_38 = arith.constant 2 : index
    %c2_39 = arith.constant 2 : index
    %c0_40 = arith.constant 0 : index
    %32 = vector.load %arg7[%c2_38, %c2_39, %c0_40] : memref<10x10x8xf32, #tpu.memory_space<vmem>>, vector<8x8x8xf32>
    %33 = vector.shape_cast %32 : vector<8x8x8xf32> to vector<64x8xf32>
    %34 = tpu.concatenate %17, %19, %21, %23, %25, %27, %29, %31, %33 in 1 : vector<64x8xf32>, vector<64x8xf32>, vector<64x8xf32>, vector<64x8xf32>, vector<64x8xf32>, vector<64x8xf32>, vector<64x8xf32>, vector<64x8xf32>, vector<64x8xf32> -> vector<64x72xf32>
    %35 = arith.truncf %34 : vector<64x72xf32> to vector<64x72xbf16>
    %c0_41 = arith.constant 0 : index
    %c0_42 = arith.constant 0 : index
    %36 = vector.load %arg3[%c0_41, %c0_42] : memref<72x8xbf16, #tpu.memory_space<vmem>>, vector<72x8xbf16>
    %cst_43 = arith.constant dense<0.000000e+00> : vector<64x8xf32>
    %37 = tpu.matmul %35, %36, %cst_43 {dimension_numbers = #tpu.dot_dimension_numbers<[1], [0], [0], [1], [0, 0, 1, 1], [], []>} : vector<64x72xbf16>, vector<72x8xbf16>, vector<64x8xf32> -> vector<64x8xf32>
    %c0_44 = arith.constant 0 : index
    %c0_45 = arith.constant 0 : index
    %c0_46 = arith.constant 0 : index
    %38 = vector.load %arg6[%c0_44, %c0_45, %c0_46] : memref<1x64x8xf32, #tpu.memory_space<vmem>>, vector<1x64x8xf32>
    %39 = vector.shape_cast %38 : vector<1x64x8xf32> to vector<64x8xf32>
    %40 = vector.shape_cast %37 : vector<64x8xf32> to vector<1x64x8xf32>
    tpu.vector_store %arg6[%c0_44, %c0_45, %c0_46], %40 {strides = array<i32>} : memref<1x64x8xf32, #tpu.memory_space<vmem>>, vector<1x64x8xf32>,
    return
  }
  func.func @transform_0(%arg0: i32) -> (i32, i32, i32) {
    %c0_i32 = arith.constant 0 : i32
    %c0_i32_0 = arith.constant 0 : i32
    %c0_i32_1 = arith.constant 0 : i32
    return %arg0, %c0_i32, %c0_i32_0 : i32, i32, i32
  }
  func.func @transform_1(%arg0: i32) -> (i32, i32) {
    %c0_i32 = arith.constant 0 : i32
    %c0_i32_0 = arith.constant 0 : i32
    %c0_i32_1 = arith.constant 0 : i32
    return %c0_i32, %c0_i32_0 : i32, i32
  }
  func.func @transform_2(%arg0: i32) -> (i32, i32) {
    %c0_i32 = arith.constant 0 : i32
    %c0_i32_0 = arith.constant 0 : i32
    %c0_i32_1 = arith.constant 0 : i32
    return %c0_i32, %c0_i32_0 : i32, i32
  }
  func.func @transform_3(%arg0: i32) -> (i32, i32) {
    %c0_i32 = arith.constant 0 : i32
    %c0_i32_0 = arith.constant 0 : i32
    %c0_i32_1 = arith.constant 0 : i32
    return %c0_i32, %c0_i32_0 : i32, i32
  }
  func.func @transform_4(%arg0: i32) -> (i32, i32) {
    %c0_i32 = arith.constant 0 : i32
    %c0_i32_0 = arith.constant 0 : i32
    %c0_i32_1 = arith.constant 0 : i32
    return %c0_i32, %c0_i32_0 : i32, i32
  }
  func.func @transform_5(%arg0: i32) -> (i32, i32, i32) {
    %c0_i32 = arith.constant 0 : i32
    %c0_i32_0 = arith.constant 0 : i32
    %c0_i32_1 = arith.constant 0 : i32
    return %arg0, %c0_i32, %c0_i32_0 : i32, i32, i32
  }
}

</mosaic_0001>

<llo_original>
// kernel: adjust_block_forward.1
$region0: #{adjust_block_forward.1}
  #allocation0 [shape = 'u32[]', space=smem, size = 0x4, offset = 0x4, fixed_abs, tag = 'smem constant byte address 0x4 - core index']
  #allocation1 [shape = 'u32[144,128]{1,0:T(1,128)}', space=vmem, size = 0x12000, scoped, tag = 'internal scratch']
  #allocation2 [shape = 'f32[10,10,8]{2,1,0:T(8,128)}', space=vmem, size = 0x14000, scoped, tag = 'scratch operand']
  %s0 = inlined_call_operand.vmem [shape: bf16[2,64,36], index: 0, kind: input, shape index: {}]
  %s1 = inlined_call_operand.vmem [shape: bf16[36,8], index: 1, kind: input, shape index: {}]
  %s2 = inlined_call_operand.vmem [shape: bf16[72,8], index: 2, kind: input, shape index: {}]
  %s3 = inlined_call_operand.vmem [shape: f32[1,8], index: 3, kind: input, shape index: {}]
  %s4 = inlined_call_operand.vmem [shape: f32[1,8], index: 4, kind: input, shape index: {}]
  %s5 = inlined_call_operand.vmem [shape: f32[2,64,8], index: 5, kind: output, shape index: {}]
  %s6 = sld [smem:[#allocation0]]
  $region53: #{adjust_block_forward.1} parent=0
    _
  %s8 = ssub.s32 1, %s6
  %s9 = scalar_select 0, %s8, %s6
  loop: start=0, step=1, limit=4
  $region2: #{adjust_block_forward.1} parent=0 // loop_pre_header
    _
  $region3: #{adjust_block_forward.1} parent=0 // loop_header
    %s11 = sphi 0, %s15
    %p12 = scmp.ge.s32.totalorder %s11, 4
    %s21 = sphi 0, %s23
    %s24 = sphi 0, %s21
    %s25 = sphi 0, %s24
    %s41 = sphi 0, %s25
    %s45 = sphi 0, %s45
    %s47 = sphi 0, %s45
    %s48 = sphi 0, %s47
    %s62 = sphi 0, %s48
    %s66 = sphi 0, %s66
    %s68 = sphi 0, %s66
    %s69 = sphi 0, %s68
    %s83 = sphi 0, %s69
    %s87 = sphi 0, %s87
    %s89 = sphi 0, %s87
    %s90 = sphi 0, %s89
    %s104 = sphi 0, %s90
    %s108 = sphi 0, %s108
    %s110 = sphi 0, %s108
    %s111 = sphi 0, %s110
    %s125 = sphi 0, %s111
    %s131 = sphi 0, %s133
    %s134 = sphi 0, %s131
    %s135 = sphi 0, %s134
    %s151 = sphi 0, %s135
  $region4: #{adjust_block_forward.1} parent=0 // loop_header_branch
    %14 = sbr.rel (%p12) target = $region8
  $region5: #{adjust_block_forward.1} parent=0 // loop_body
    %s16 = ssub.s32 %s11, 1
    %s17 = ssub.s32 %s11, 2
    %s18 = sadd.s32 %s11, 1
    %s19 = ssub.s32 %s11, %s18
    %p20 = scmp.eq.s32.totalorder %s19, 0
    %s22 = sadd.s32 %s21, 1
    %s23 = scalar_select %p20, %s21, %s22
    %p26 = pneg %p20
    %p27 = scmp.eq.s32.totalorder %s11, 1
    %p28 = por %p26, %p27
    %p29 = scmp.ne.s32.totalorder %s21, %s24
    %p30 = scmp.eq.s32.totalorder %s11, 0
    %p31 = por %p29, %p30
    %p32 = scmp.ne.s32.totalorder %s21, %s24
    %p33 = scmp.eq.s32.totalorder %s16, 1
    %p34 = por %p32, %p33
    %p35 = scmp.ne.s32.totalorder %s24, %s25
    %p36 = scmp.eq.s32.totalorder %s16, 0
    %p37 = por %p35, %p36
    %p38 = scmp.ne.s32.totalorder %s24, %s25
    %p39 = scmp.eq.s32.totalorder %s17, 1
    %p40 = por %p38, %p39
    %p42 = scmp.ne.s32.totalorder %s25, %s41
    %p43 = scmp.eq.s32.totalorder %s17, 0
    %p44 = por %p42, %p43
    %s46 = sadd.s32 %s45, 1
    %p49 = scmp.eq.s32.totalorder %s11, 1
    %p50 = scmp.ne.s32.totalorder %s45, %s47
    %p51 = scmp.eq.s32.totalorder %s11, 0
    %p52 = por %p50, %p51
    %p53 = scmp.ne.s32.totalorder %s45, %s47
    %p54 = scmp.eq.s32.totalorder %s16, 1
    %p55 = por %p53, %p54
    %p56 = scmp.ne.s32.totalorder %s47, %s48
    %p57 = scmp.eq.s32.totalorder %s16, 0
    %p58 = por %p56, %p57
    %p59 = scmp.ne.s32.totalorder %s47, %s48
    %p60 = scmp.eq.s32.totalorder %s17, 1
    %p61 = por %p59, %p60
    %p63 = scmp.ne.s32.totalorder %s48, %s62
    %p64 = scmp.eq.s32.totalorder %s17, 0
    %p65 = por %p63, %p64
    %s67 = sadd.s32 %s66, 1
    %p70 = scmp.eq.s32.totalorder %s11, 1
    %p71 = scmp.ne.s32.totalorder %s66, %s68
    %p72 = scmp.eq.s32.totalorder %s11, 0
    %p73 = por %p71, %p72
    %p74 = scmp.ne.s32.totalorder %s66, %s68
    %p75 = scmp.eq.s32.totalorder %s16, 1
    %p76 = por %p74, %p75
    %p77 = scmp.ne.s32.totalorder %s68, %s69
    %p78 = scmp.eq.s32.totalorder %s16, 0
    %p79 = por %p77, %p78
    %p80 = scmp.ne.s32.totalorder %s68, %s69
    %p81 = scmp.eq.s32.totalorder %s17, 1
    %p82 = por %p80, %p81
    %p84 = scmp.ne.s32.totalorder %s69, %s83
    %p85 = scmp.eq.s32.totalorder %s17, 0
    %p86 = por %p84, %p85
    %s88 = sadd.s32 %s87, 1
    %p91 = scmp.eq.s32.totalorder %s11, 1
    %p92 = scmp.ne.s32.totalorder %s87, %s89
    %p93 = scmp.eq.s32.totalorder %s11, 0
    %p94 = por %p92, %p93
    %p95 = scmp.ne.s32.totalorder %s87, %s89
    %p96 = scmp.eq.s32.totalorder %s16, 1
    %p97 = por %p95, %p96
    %p98 = scmp.ne.s32.totalorder %s89, %s90
    %p99 = scmp.eq.s32.totalorder %s16, 0
    %p100 = por %p98, %p99
    %p101 = scmp.ne.s32.totalorder %s89, %s90
    %p102 = scmp.eq.s32.totalorder %s17, 1
    %p103 = por %p101, %p102
    %p105 = scmp.ne.s32.totalorder %s90, %s104
    %p106 = scmp.eq.s32.totalorder %s17, 0
    %p107 = por %p105, %p106
    %s109 = sadd.s32 %s108, 1
    %p112 = scmp.eq.s32.totalorder %s11, 1
    %p113 = scmp.ne.s32.totalorder %s108, %s110
    %p114 = scmp.eq.s32.totalorder %s11, 0
    %p115 = por %p113, %p114
    %p116 = scmp.ne.s32.totalorder %s108, %s110
    %p117 = scmp.eq.s32.totalorder %s16, 1
    %p118 = por %p116, %p117
    %p119 = scmp.ne.s32.totalorder %s110, %s111
    %p120 = scmp.eq.s32.totalorder %s16, 0
    %p121 = por %p119, %p120
    %p122 = scmp.ne.s32.totalorder %s110, %s111
    %p123 = scmp.eq.s32.totalorder %s17, 1
    %p124 = por %p122, %p123
    %p126 = scmp.ne.s32.totalorder %s111, %s125
    %p127 = scmp.eq.s32.totalorder %s17, 0
    %p128 = por %p126, %p127
    %s129 = ssub.s32 %s11, %s18
    %p130 = scmp.eq.s32.totalorder %s129, 0
    %s132 = sadd.s32 %s131, 1
    %s133 = scalar_select %p130, %s131, %s132
    %p136 = pneg %p130
    %p137 = scmp.eq.s32.totalorder %s11, 1
    %p138 = por %p136, %p137
    %p139 = scmp.ne.s32.totalorder %s131, %s134
    %p140 = scmp.eq.s32.totalorder %s11, 0
    %p141 = por %p139, %p140
    %p142 = scmp.ne.s32.totalorder %s131, %s134
    %p143 = scmp.eq.s32.totalorder %s16, 1
    %p144 = por %p142, %p143
    %p145 = scmp.ne.s32.totalorder %s134, %s135
    %p146 = scmp.eq.s32.totalorder %s16, 0
    %p147 = por %p145, %p146
    %p148 = scmp.ne.s32.totalorder %s134, %s135
    %p149 = scmp.eq.s32.totalorder %s17, 1
    %p150 = por %p148, %p149
    %p152 = scmp.ne.s32.totalorder %s135, %s151
    %p153 = scmp.eq.s32.totalorder %s17, 0
    %p154 = por %p152, %p153
    %p155 = scmp.le.s32.totalorder 1, %s11
    %p156 = scmp.lt.s32.totalorder %s11, 3
    %p157 = pnand %p155, %p156
    %p158 = pneg %p157
    // Predicated region
    $region9: #{adjust_block_forward.1} parent=5 // pred_check
      _
    $region10: #{adjust_block_forward.1} parent=5 // pred_check_branch
      %160 = sbr.rel (%p157) target = $region12
    $region11: #{adjust_block_forward.1} parent=5 // pred_region
      %s161 = ssub.s32 %s11, 1
      // Predicated region
      $region13: #{adjust_block_forward.1} parent=11 // pred_check
        %p162 = pneg %p58
      $region14: #{adjust_block_forward.1} parent=11 // pred_check_branch
        %164 = sbr.rel (%p162) target = $region16
      $region15: #{adjust_block_forward.1} parent=11 // pred_region
        _
      $region16: #{adjust_block_forward.1} parent=11 // pred_fallthru
        _
      // Predicated region
      $region17: #{adjust_block_forward.1} parent=11 // pred_check
        %p165 = pneg %p79
      $region18: #{adjust_block_forward.1} parent=11 // pred_check_branch
        %167 = sbr.rel (%p165) target = $region20
      $region19: #{adjust_block_forward.1} parent=11 // pred_region
        _
      $region20: #{adjust_block_forward.1} parent=11 // pred_fallthru
        _
      // Predicated region
      $region21: #{adjust_block_forward.1} parent=11 // pred_check
        %p168 = pneg %p100
      $region22: #{adjust_block_forward.1} parent=11 // pred_check_branch
        %170 = sbr.rel (%p168) target = $region24
      $region23: #{adjust_block_forward.1} parent=11 // pred_region
        _
      $region24: #{adjust_block_forward.1} parent=11 // pred_fallthru
        _
      // Predicated region
      $region25: #{adjust_block_forward.1} parent=11 // pred_check
        %p171 = pneg %p121
      $region26: #{adjust_block_forward.1} parent=11 // pred_check_branch
        %173 = sbr.rel (%p171) target = $region28
      $region27: #{adjust_block_forward.1} parent=11 // pred_region
        _
      $region28: #{adjust_block_forward.1} parent=11 // pred_fallthru
        _
    $region12: #{adjust_block_forward.1} parent=5 // pred_fallthru
      _
    %p174 = scmp.lt.s32.totalorder %s11, 2
    // Predicated region
    $region29: #{adjust_block_forward.1} parent=5 // pred_check
      %p175 = pneg %p174
    $region30: #{adjust_block_forward.1} parent=5 // pred_check_branch
      %177 = sbr.rel (%p175) target = $region32
    $region31: #{adjust_block_forward.1} parent=5 // pred_region
      // Predicated region
      $region33: #{adjust_block_forward.1} parent=31 // pred_check
        %p178 = pneg %p31
      $region34: #{adjust_block_forward.1} parent=31 // pred_check_branch
        %180 = sbr.rel (%p178) target = $region36
      $region35: #{adjust_block_forward.1} parent=31 // pred_region
        %p181 = scmp.lt.s32.totalorder %s11, 1
        %s182 = scalar_select %p181, %s11, 1
        %s183 = smul.addr %s182, 8
        %s184 = smul.addr %s183, 4
        %s185 = scalar_lea.vmem %s0, %s184
      $region36: #{adjust_block_forward.1} parent=31 // pred_fallthru
        _
    $region32: #{adjust_block_forward.1} parent=5 // pred_fallthru
      _
    %p186 = scmp.le.s32.totalorder 1, %s11
    %p187 = scmp.lt.s32.totalorder %s11, 3
    %p188 = pnand %p186, %p187
    %p189 = pneg %p188
    // Predicated region
    $region37: #{adjust_block_forward.1} parent=5 // pred_check
      _
    $region38: #{adjust_block_forward.1} parent=5 // pred_check_branch
      %191 = sbr.rel (%p188) target = $region40
    $region39: #{adjust_block_forward.1} parent=5 // pred_region
      %s192 = ssub.s32 %s11, 1
      %p193 = scmp.lt.s32.totalorder %s16, 1
      %s194 = scalar_select %p193, %s16, 1
      %s195 = smul.addr %s194, 8
      %s196 = smul.addr %s195, 4
      %s197 = scalar_lea.vmem %s0, %s196
      %p198 = pneg %p37
      %p199 = pneg %p34
      %p200 = pneg %p58
      %p201 = pneg %p55
      %p202 = pneg %p79
      %p203 = pneg %p76
      %p204 = pneg %p100
      %p205 = pneg %p97
      %p206 = pneg %p121
      %p207 = pneg %p118
      %p208 = pneg %p147
      %p209 = pneg %p144
      %p210 = scmp.lt.s32.totalorder %s16, 1
      %s211 = scalar_select %p210, %s16, 1
      %s212 = smul.addr %s211, 8
      %s213 = smul.addr %s212, 8
      %s214 = scalar_lea.vmem %s5, %s213
      %p215 = scmp.lt.s32.totalorder %s16, 1
      %s216 = scalar_select %p215, %s16, 1
      %s217 = smul.addr %s216, 8
      %s218 = smul.addr %s217, 4
      %s219 = scalar_lea.vmem %s0, %s218
      %p220 = scmp.lt.s32.totalorder %s16, 1
      %s221 = scalar_select %p220, %s16, 1
      %s222 = smul.addr %s221, 8
      %s223 = smul.addr %s222, 8
      %s224 = scalar_lea.vmem %s5, %s223
      %v226 = vld [vmem:[%s219] sm:$0xf]
      %v227 = vld [vmem:[%s219 + $0x4] sm:$0xf]
      %v228 = vld [vmem:[%s219 + $0x8] sm:$0xf]
      %v229 = vld [vmem:[%s219 + $0xc] sm:$0xf]
      %v230 = vld [vmem:[%s219 + $0x10] sm:$0xf]
      %v231 = vld [vmem:[%s219 + $0x14] sm:$0xf]
      %v232 = vld [vmem:[%s219 + $0x18] sm:$0xf]
      %v233 = vld [vmem:[%s219 + $0x1c] sm:$0xf]
      %v234 = vld [vmem:[%s1] sm:$0xf]
      %v235 = vld [vmem:[%s1 + $0x4] sm:$0xf]
      %v236 = vld [vmem:[%s1 + $0x8] sm:$0xf]
      %v237 = vld [vmem:[%s1 + $0xc] sm:$0xf]
      %v238 = vld [vmem:[%s1 + $0x10] sm:$0x3]
      %v247 = vunpack.c.l.b16 %v226
      %v248 = vunpack.c.l.b16 %v227
      %v249 = vunpack.c.l.b16 %v228
      %v250 = vunpack.c.l.b16 %v229
      %v251 = vunpack.c.l.b16 %v230
      %v252 = vunpack.c.l.b16 %v231
      %v253 = vunpack.c.l.b16 %v232
      %v254 = vunpack.c.l.b16 %v233
      %v255 = vpack.c.b16 %v248, %v247
      %v256 = vpack.c.b16 %v250, %v249
      %v257 = vpack.c.b16 %v252, %v251
      %v258 = vpack.c.b16 %v254, %v253
      %v264 = vunpack.c.l.b16 %v234
      %v265 = vunpack.c.l.b16 %v235
      %v266 = vunpack.c.l.b16 %v236
      %v267 = vunpack.c.l.b16 %v237
      %v268 = vunpack.c.l.b16 %v238
      %v269 = vpack.c.b16 %v265, %v264
      %v270 = vpack.c.b16 %v267, %v266
      %v271 = vpack.c.b16 %v268, %v268
      %vm274 = vcmask 293888
      %v276 = vsel %vm274, %v255, 0
      %v279 = vsel %vm274, %v256, 0
      %v282 = vsel %vm274, %v257, 0
      %v285 = vsel %vm274, %v258, 0
      %vm287 = vcmask 1041408
      %v289 = vsel %vm287, %v271, 0
      %291 = vmatprep.subr.bf16.mxu0 0
      %292 = vmatpush1.bf16.msra.mxu0 %v269
      %293 = vmatprep.subr.bf16.mxu0 0
      %294 = vmatpush1.bf16.msra.mxu0 %v270
      %295 = vmatprep.subr.bf16.mxu0 0
      %296 = vmatpush1.bf16.msra.mxu0 %v289
      %297 = vmatprep.subr.bf16.mxu0 0
      %298 = vmatpush1.bf16.msra.mxu0 0
      %299 = vmatprep.subr.bf16.mxu0 0
      %300 = vmatpush1.bf16.msra.mxu0 0
      %301 = vmatprep.subr.bf16.mxu0 0
      %302 = vmatpush1.bf16.msra.mxu0 0
      %303 = vmatprep.subr.bf16.mxu0 0
      %304 = vmatpush1.bf16.msra.mxu0 0
      %305 = vmatprep.subr.bf16.mxu0 0
      %306 = vmatpush1.bf16.msra.mxu0 0
      %307 = vmatprep.subr.bf16.mxu0 0
      %308 = vmatpush1.bf16.msra.mxu0 0
      %309 = vmatprep.subr.bf16.mxu0 0
      %310 = vmatpush1.bf16.msra.mxu0 0
      %311 = vmatprep.subr.bf16.mxu0 0
      %312 = vmatpush1.bf16.msra.mxu0 0
      %313 = vmatprep.subr.bf16.mxu0 0
      %314 = vmatpush1.bf16.msra.mxu0 0
      %315 = vmatprep.subr.bf16.mxu0 0
      %316 = vmatpush1.bf16.msra.mxu0 0
      %317 = vmatprep.subr.bf16.mxu0 0
      %318 = vmatpush1.bf16.msra.mxu0 0
      %319 = vmatprep.subr.bf16.mxu0 0
      %320 = vmatpush1.bf16.msra.mxu0 0
      %321 = vmatprep.subr.bf16.mxu0 0
      %322 = vmatpush1.bf16.msra.mxu0 0
      %323 = vmatprep.mubr.bf16.mxu0 0
      %324 = vmatmul.mubr.bf16.gmra.mrb[0].mxu0 %v276
      %v325 = vpop.f32.mrb[0].mxu0
      %v326 = vadd.f32 0.0, %v325
      %v327 = vpop.f32.mrb[0].mxu0
      %v328 = vpop.f32.mrb[0].mxu0
      %v329 = vadd.f32 0.0, %v328
      %v330 = vpop.f32.mrb[0].mxu0
      %331 = vmatprep.mubr.bf16.mxu0 0
      %332 = vmatmul.mubr.bf16.gmra.mrb[0].mxu0 %v279
      %v333 = vpop.f32.mrb[0].mxu0
      %v334 = vadd.f32 0.0, %v333
      %v335 = vpop.f32.mrb[0].mxu0
      %v336 = vpop.f32.mrb[0].mxu0
      %v337 = vadd.f32 0.0, %v336
      %v338 = vpop.f32.mrb[0].mxu0
      %339 = vmatprep.mubr.bf16.mxu0 0
      %340 = vmatmul.mubr.bf16.gmra.mrb[0].mxu0 %v282
      %v341 = vpop.f32.mrb[0].mxu0
      %v342 = vadd.f32 0.0, %v341
      %v343 = vpop.f32.mrb[0].mxu0
      %v344 = vpop.f32.mrb[0].mxu0
      %v345 = vadd.f32 0.0, %v344
      %v346 = vpop.f32.mrb[0].mxu0
      %347 = vmatprep.mubr.bf16.mxu0 0
      %348 = vmatmul.mubr.bf16.gmra.mrb[0].mxu0 %v285
      %v349 = vpop.f32.mrb[0].mxu0
      %v350 = vadd.f32 0.0, %v349
      %v351 = vpop.f32.mrb[0].mxu0
      %v352 = vpop.f32.mrb[0].mxu0
      %v353 = vadd.f32 0.0, %v352
      %v354 = vpop.f32.mrb[0].mxu0
      %355 = vdwg.mxu0
      %v356 = vld [vmem:[%s3] sm:$0x1]
      %v358 = vlaneseq
      %v359 = vshrl.u32 %v358, 7
      %v360 = vsub.s32 0, %v359
      %v361 = vrot.slane %v356, %v360
      %v363 = vmul.f32 %v326, %v361
      %v364 = vmul.f32 %v329, %v361
      %v365 = vmul.f32 %v334, %v361
      %v366 = vmul.f32 %v337, %v361
      %v367 = vmul.f32 %v342, %v361
      %v368 = vmul.f32 %v345, %v361
      %v369 = vmul.f32 %v350, %v361
      %v370 = vmul.f32 %v353, %v361
      %v371 = vld [vmem:[%s4] sm:$0x1]
      %v373 = vlaneseq
      %v374 = vshrl.u32 %v373, 7
      %v375 = vsub.s32 0, %v374
      %v376 = vrot.slane %v371, %v375
      %v378 = vadd.f32 %v363, %v376
      %v379 = vadd.f32 %v364, %v376
      %v380 = vadd.f32 %v365, %v376
      %v381 = vadd.f32 %v366, %v376
      %v382 = vadd.f32 %v367, %v376
      %v383 = vadd.f32 %v368, %v376
      %v384 = vadd.f32 %v369, %v376
      %v385 = vadd.f32 %v370, %v376
      %v386 = vmax.f32 %v378, 0.0
      %v387 = vmax.f32 %v379, 0.0
      %v388 = vmax.f32 %v380, 0.0
      %v389 = vmax.f32 %v381, 0.0
      %v390 = vmax.f32 %v382, 0.0
      %v391 = vmax.f32 %v383, 0.0
      %v392 = vmax.f32 %v384, 0.0
      %v393 = vmax.f32 %v385, 0.0
      %vm394 = vcmask 64512
      %395 = vst.msk [vmem:[#allocation2] sm:$0xff] %vm394, 0.0
      %vm396 = vcmask 58368
      %397 = vst.msk [vmem:[#allocation2 + $0x8] sm:$0x3] %vm396, 0.0
      %398 = vst.msk [vmem:[#allocation2 + $0x10] sm:$0xff] %vm394, 0.0
      %399 = vst.msk [vmem:[#allocation2 + $0x18] sm:$0x3] %vm396, 0.0
      %400 = vst.msk [vmem:[#allocation2 + $0x20] sm:$0xff] %vm394, 0.0
      %401 = vst.msk [vmem:[#allocation2 + $0x28] sm:$0x3] %vm396, 0.0
      %402 = vst.msk [vmem:[#allocation2 + $0x30] sm:$0xff] %vm394, 0.0
      %403 = vst.msk [vmem:[#allocation2 + $0x38] sm:$0x3] %vm396, 0.0
      %404 = vst.msk [vmem:[#allocation2 + $0x40] sm:$0xff] %vm394, 0.0
      %405 = vst.msk [vmem:[#allocation2 + $0x48] sm:$0x3] %vm396, 0.0
      %406 = vst.msk [vmem:[#allocation2 + $0x50] sm:$0xff] %vm394, 0.0
      %407 = vst.msk [vmem:[#allocation2 + $0x58] sm:$0x3] %vm396, 0.0
      %408 = vst.msk [vmem:[#allocation2 + $0x60] sm:$0xff] %vm394, 0.0
      %409 = vst.msk [vmem:[#allocation2 + $0x68] sm:$0x3] %vm396, 0.0
      %410 = vst.msk [vmem:[#allocation2 + $0x70] sm:$0xff] %vm394, 0.0
      %411 = vst.msk [vmem:[#allocation2 + $0x78] sm:$0x3] %vm396, 0.0
      %412 = vst.msk [vmem:[#allocation2 + $0x80] sm:$0xff] %vm394, 0.0
      %413 = vst.msk [vmem:[#allocation2 + $0x88] sm:$0x3] %vm396, 0.0
      %414 = vst.msk [vmem:[#allocation2 + $0x90] sm:$0xff] %vm394, 0.0
      %415 = vst.msk [vmem:[#allocation2 + $0x98] sm:$0x3] %vm396, 0.0
      %s416 = scalar_lea.vmem [#allocation2], 16
      %417 = vst.msk [vmem:[%s416 + $0x1] sm:$0xff] %vm394, %v386
      %418 = vst.msk [vmem:[%s416 + $0x11] sm:$0xff] %vm394, %v387
      %419 = vst.msk [vmem:[%s416 + $0x21] sm:$0xff] %vm394, %v388
      %420 = vst.msk [vmem:[%s416 + $0x31] sm:$0xff] %vm394, %v389
      %421 = vst.msk [vmem:[%s416 + $0x41] sm:$0xff] %vm394, %v390
      %422 = vst.msk [vmem:[%s416 + $0x51] sm:$0xff] %vm394, %v391
      %423 = vst.msk [vmem:[%s416 + $0x61] sm:$0xff] %vm394, %v392
      %424 = vst.msk [vmem:[%s416 + $0x71] sm:$0xff] %vm394, %v393
      %v425 = vld [vmem:[#allocation2] sm:$0xff]
      %v426 = vld [vmem:[#allocation2 + $0x10] sm:$0xff]
      %v427 = vld [vmem:[#allocation2 + $0x20] sm:$0xff]
      %v428 = vld [vmem:[#allocation2 + $0x30] sm:$0xff]
      %v429 = vld [vmem:[#allocation2 + $0x40] sm:$0xff]
      %v430 = vld [vmem:[#allocation2 + $0x50] sm:$0xff]
      %v431 = vld [vmem:[#allocation2 + $0x60] sm:$0xff]
      %v432 = vld [vmem:[#allocation2 + $0x70] sm:$0xff]
      %v433 = vld [vmem:[#allocation2 + $0x1] sm:$0xff]
      %v434 = vld [vmem:[#allocation2 + $0x11] sm:$0xff]
      %v435 = vld [vmem:[#allocation2 + $0x21] sm:$0xff]
      %v436 = vld [vmem:[#allocation2 + $0x31] sm:$0xff]
      %v437 = vld [vmem:[#allocation2 + $0x41] sm:$0xff]
      %v438 = vld [vmem:[#allocation2 + $0x51] sm:$0xff]
      %v439 = vld [vmem:[#allocation2 + $0x61] sm:$0xff]
      %v440 = vld [vmem:[#allocation2 + $0x71] sm:$0xff]
      %v441 = vld [vmem:[#allocation2 + $0x2] sm:$0xff]
      %v442 = vld [vmem:[#allocation2 + $0x12] sm:$0xff]
      %v443 = vld [vmem:[#allocation2 + $0x22] sm:$0xff]
      %v444 = vld [vmem:[#allocation2 + $0x32] sm:$0xff]
      %v445 = vld [vmem:[#allocation2 + $0x42] sm:$0xff]
      %v446 = vld [vmem:[#allocation2 + $0x52] sm:$0xff]
      %v447 = vld [vmem:[#allocation2 + $0x62] sm:$0xff]
      %v448 = vld [vmem:[#allocation2 + $0x72] sm:$0xff]
      %v449 = vld [vmem:[%s416] sm:$0xff]
      %v450 = vld [vmem:[%s416 + $0x10] sm:$0xff]
      %v451 = vld [vmem:[%s416 + $0x20] sm:$0xff]
      %v452 = vld [vmem:[%s416 + $0x30] sm:$0xff]
      %v453 = vld [vmem:[%s416 + $0x40] sm:$0xff]
      %v454 = vld [vmem:[%s416 + $0x50] sm:$0xff]
      %v455 = vld [vmem:[%s416 + $0x60] sm:$0xff]
      %v456 = vld [vmem:[%s416 + $0x70] sm:$0xff]
      %v457 = vld [vmem:[%s416 + $0x1] sm:$0xff]
      %v458 = vld [vmem:[%s416 + $0x11] sm:$0xff]
      %v459 = vld [vmem:[%s416 + $0x21] sm:$0xff]
      %v460 = vld [vmem:[%s416 + $0x31] sm:$0xff]
      %v461 = vld [vmem:[%s416 + $0x41] sm:$0xff]
      %v462 = vld [vmem:[%s416 + $0x51] sm:$0xff]
      %v463 = vld [vmem:[%s416 + $0x61] sm:$0xff]
      %v464 = vld [vmem:[%s416 + $0x71] sm:$0xff]
      %v465 = vld [vmem:[%s416 + $0x2] sm:$0xff]
      %v466 = vld [vmem:[%s416 + $0x12] sm:$0xff]
      %v467 = vld [vmem:[%s416 + $0x22] sm:$0xff]
      %v468 = vld [vmem:[%s416 + $0x32] sm:$0xff]
      %v469 = vld [vmem:[%s416 + $0x42] sm:$0xff]
      %v470 = vld [vmem:[%s416 + $0x52] sm:$0xff]
      %v471 = vld [vmem:[%s416 + $0x62] sm:$0xff]
      %v472 = vld [vmem:[%s416 + $0x72] sm:$0xff]
      %s473 = scalar_lea.vmem [#allocation2], 32
      %v474 = vld [vmem:[%s473] sm:$0xff]
      %v475 = vld [vmem:[%s473 + $0x10] sm:$0xff]
      %v476 = vld [vmem:[%s473 + $0x20] sm:$0xff]
      %v477 = vld [vmem:[%s473 + $0x30] sm:$0xff]
      %v478 = vld [vmem:[%s473 + $0x40] sm:$0xff]
      %v479 = vld [vmem:[%s473 + $0x50] sm:$0xff]
      %v480 = vld [vmem:[%s473 + $0x60] sm:$0xff]
      %v481 = vld [vmem:[%s473 + $0x70] sm:$0xff]
      %v482 = vld [vmem:[%s473 + $0x1] sm:$0xff]
      %v483 = vld [vmem:[%s473 + $0x11] sm:$0xff]
      %v484 = vld [vmem:[%s473 + $0x21] sm:$0xff]
      %v485 = vld [vmem:[%s473 + $0x31] sm:$0xff]
      %v486 = vld [vmem:[%s473 + $0x41] sm:$0xff]
      %v487 = vld [vmem:[%s473 + $0x51] sm:$0xff]
      %v488 = vld [vmem:[%s473 + $0x61] sm:$0xff]
      %v489 = vld [vmem:[%s473 + $0x71] sm:$0xff]
      %v490 = vld [vmem:[%s473 + $0x2] sm:$0xff]
      %v491 = vld [vmem:[%s473 + $0x12] sm:$0xff]
      %v492 = vld [vmem:[%s473 + $0x22] sm:$0xff]
      %v493 = vld [vmem:[%s473 + $0x32] sm:$0xff]
      %v494 = vld [vmem:[%s473 + $0x42] sm:$0xff]
      %v495 = vld [vmem:[%s473 + $0x52] sm:$0xff]
      %v496 = vld [vmem:[%s473 + $0x62] sm:$0xff]
      %v497 = vld [vmem:[%s473 + $0x72] sm:$0xff]
      %506 = vrot.lane.b32.xlu0 %v433, 8
      %v507 = vpop.permute.xlu0 %506
      %508 = vrot.lane.b32.xlu0 %v434, 8
      %v509 = vpop.permute.xlu0 %508
      %510 = vrot.lane.b32.xlu0 %v435, 8
      %v511 = vpop.permute.xlu0 %510
      %512 = vrot.lane.b32.xlu0 %v436, 8
      %v513 = vpop.permute.xlu0 %512
      %514 = vrot.lane.b32.xlu0 %v437, 8
      %v515 = vpop.permute.xlu0 %514
      %516 = vrot.lane.b32.xlu0 %v438, 8
      %v517 = vpop.permute.xlu0 %516
      %518 = vrot.lane.b32.xlu0 %v439, 8
      %v519 = vpop.permute.xlu0 %518
      %520 = vrot.lane.b32.xlu0 %v440, 8
      %v521 = vpop.permute.xlu0 %520
      %538 = vrot.lane.b32.xlu0 %v441, 16
      %v539 = vpop.permute.xlu0 %538
      %540 = vrot.lane.b32.xlu0 %v442, 16
      %v541 = vpop.permute.xlu0 %540
      %542 = vrot.lane.b32.xlu0 %v443, 16
      %v543 = vpop.permute.xlu0 %542
      %544 = vrot.lane.b32.xlu0 %v444, 16
      %v545 = vpop.permute.xlu0 %544
      %546 = vrot.lane.b32.xlu0 %v445, 16
      %v547 = vpop.permute.xlu0 %546
      %548 = vrot.lane.b32.xlu0 %v446, 16
      %v549 = vpop.permute.xlu0 %548
      %550 = vrot.lane.b32.xlu0 %v447, 16
      %v551 = vpop.permute.xlu0 %550
      %552 = vrot.lane.b32.xlu0 %v448, 16
      %v553 = vpop.permute.xlu0 %552
      %570 = vrot.lane.b32.xlu0 %v449, 24
      %v571 = vpop.permute.xlu0 %570
      %572 = vrot.lane.b32.xlu0 %v450, 24
      %v573 = vpop.permute.xlu0 %572
      %574 = vrot.lane.b32.xlu0 %v451, 24
      %v575 = vpop.permute.xlu0 %574
      %576 = vrot.lane.b32.xlu0 %v452, 24
      %v577 = vpop.permute.xlu0 %576
      %578 = vrot.lane.b32.xlu0 %v453, 24
      %v579 = vpop.permute.xlu0 %578
      %580 = vrot.lane.b32.xlu0 %v454, 24
      %v581 = vpop.permute.xlu0 %580
      %582 = vrot.lane.b32.xlu0 %v455, 24
      %v583 = vpop.permute.xlu0 %582
      %584 = vrot.lane.b32.xlu0 %v456, 24
      %v585 = vpop.permute.xlu0 %584
      %602 = vrot.lane.b32.xlu0 %v457, 32
      %v603 = vpop.permute.xlu0 %602
      %604 = vrot.lane.b32.xlu0 %v458, 32
      %v605 = vpop.permute.xlu0 %604
      %606 = vrot.lane.b32.xlu0 %v459, 32
      %v607 = vpop.permute.xlu0 %606
      %608 = vrot.lane.b32.xlu0 %v460, 32
      %v609 = vpop.permute.xlu0 %608
      %610 = vrot.lane.b32.xlu0 %v461, 32
      %v611 = vpop.permute.xlu0 %610
      %612 = vrot.lane.b32.xlu0 %v462, 32
      %v613 = vpop.permute.xlu0 %612
      %614 = vrot.lane.b32.xlu0 %v463, 32
      %v615 = vpop.permute.xlu0 %614
      %616 = vrot.lane.b32.xlu0 %v464, 32
      %v617 = vpop.permute.xlu0 %616
      %634 = vrot.lane.b32.xlu0 %v465, 40
      %v635 = vpop.permute.xlu0 %634
      %636 = vrot.lane.b32.xlu0 %v466, 40
      %v637 = vpop.permute.xlu0 %636
      %638 = vrot.lane.b32.xlu0 %v467, 40
      %v639 = vpop.permute.xlu0 %638
      %640 = vrot.lane.b32.xlu0 %v468, 40
      %v641 = vpop.permute.xlu0 %640
      %642 = vrot.lane.b32.xlu0 %v469, 40
      %v643 = vpop.permute.xlu0 %642
      %644 = vrot.lane.b32.xlu0 %v470, 40
      %v645 = vpop.permute.xlu0 %644
      %646 = vrot.lane.b32.xlu0 %v471, 40
      %v647 = vpop.permute.xlu0 %646
      %648 = vrot.lane.b32.xlu0 %v472, 40
      %v649 = vpop.permute.xlu0 %648
      %666 = vrot.lane.b32.xlu0 %v474, 48
      %v667 = vpop.permute.xlu0 %666
      %668 = vrot.lane.b32.xlu0 %v475, 48
      %v669 = vpop.permute.xlu0 %668
      %670 = vrot.lane.b32.xlu0 %v476, 48
      %v671 = vpop.permute.xlu0 %670
      %672 = vrot.lane.b32.xlu0 %v477, 48
      %v673 = vpop.permute.xlu0 %672
      %674 = vrot.lane.b32.xlu0 %v478, 48
      %v675 = vpop.permute.xlu0 %674
      %676 = vrot.lane.b32.xlu0 %v479, 48
      %v677 = vpop.permute.xlu0 %676
      %678 = vrot.lane.b32.xlu0 %v480, 48
      %v679 = vpop.permute.xlu0 %678
      %680 = vrot.lane.b32.xlu0 %v481, 48
      %v681 = vpop.permute.xlu0 %680
      %698 = vrot.lane.b32.xlu0 %v482, 56
      %v699 = vpop.permute.xlu0 %698
      %700 = vrot.lane.b32.xlu0 %v483, 56
      %v701 = vpop.permute.xlu0 %700
      %702 = vrot.lane.b32.xlu0 %v484, 56
      %v703 = vpop.permute.xlu0 %702
      %704 = vrot.lane.b32.xlu0 %v485, 56
      %v705 = vpop.permute.xlu0 %704
      %706 = vrot.lane.b32.xlu0 %v486, 56
      %v707 = vpop.permute.xlu0 %706
      %708 = vrot.lane.b32.xlu0 %v487, 56
      %v709 = vpop.permute.xlu0 %708
      %710 = vrot.lane.b32.xlu0 %v488, 56
      %v711 = vpop.permute.xlu0 %710
      %712 = vrot.lane.b32.xlu0 %v489, 56
      %v713 = vpop.permute.xlu0 %712
      %730 = vrot.lane.b32.xlu0 %v490, 64
      %v731 = vpop.permute.xlu0 %730
      %732 = vrot.lane.b32.xlu0 %v491, 64
      %v733 = vpop.permute.xlu0 %732
      %734 = vrot.lane.b32.xlu0 %v492, 64
      %v735 = vpop.permute.xlu0 %734
      %736 = vrot.lane.b32.xlu0 %v493, 64
      %v737 = vpop.permute.xlu0 %736
      %738 = vrot.lane.b32.xlu0 %v494, 64
      %v739 = vpop.permute.xlu0 %738
      %740 = vrot.lane.b32.xlu0 %v495, 64
      %v741 = vpop.permute.xlu0 %740
      %742 = vrot.lane.b32.xlu0 %v496, 64
      %v743 = vpop.permute.xlu0 %742
      %744 = vrot.lane.b32.xlu0 %v497, 64
      %v745 = vpop.permute.xlu0 %744
      %v754 = vsel %vm394, %v425, %v507
      %v755 = vsel %vm394, %v426, %v509
      %v756 = vsel %vm394, %v427, %v511
      %v757 = vsel %vm394, %v428, %v513
      %v758 = vsel %vm394, %v429, %v515
      %v759 = vsel %vm394, %v430, %v517
      %v760 = vsel %vm394, %v431, %v519
      %v761 = vsel %vm394, %v432, %v521
      %vm762 = vcmask 130048
      %v763 = vsel %vm762, %v754, %v539
      %v764 = vsel %vm762, %v755, %v541
      %v765 = vsel %vm762, %v756, %v543
      %v766 = vsel %vm762, %v757, %v545
      %v767 = vsel %vm762, %v758, %v547
      %v768 = vsel %vm762, %v759, %v549
      %v769 = vsel %vm762, %v760, %v551
      %v770 = vsel %vm762, %v761, %v553
      %vm771 = vcmask 195584
      %v772 = vsel %vm771, %v763, %v571
      %v773 = vsel %vm771, %v764, %v573
      %v774 = vsel %vm771, %v765, %v575
      %v775 = vsel %vm771, %v766, %v577
      %v776 = vsel %vm771, %v767, %v579
      %v777 = vsel %vm771, %v768, %v581
      %v778 = vsel %vm771, %v769, %v583
      %v779 = vsel %vm771, %v770, %v585
      %vm780 = vcmask 261120
      %v781 = vsel %vm780, %v772, %v603
      %v782 = vsel %vm780, %v773, %v605
      %v783 = vsel %vm780, %v774, %v607
      %v784 = vsel %vm780, %v775, %v609
      %v785 = vsel %vm780, %v776, %v611
      %v786 = vsel %vm780, %v777, %v613
      %v787 = vsel %vm780, %v778, %v615
      %v788 = vsel %vm780, %v779, %v617
      %vm789 = vcmask 326656
      %v790 = vsel %vm789, %v781, %v635
      %v791 = vsel %vm789, %v782, %v637
      %v792 = vsel %vm789, %v783, %v639
      %v793 = vsel %vm789, %v784, %v641
      %v794 = vsel %vm789, %v785, %v643
      %v795 = vsel %vm789, %v786, %v645
      %v796 = vsel %vm789, %v787, %v647
      %v797 = vsel %vm789, %v788, %v649
      %vm798 = vcmask 392192
      %v799 = vsel %vm798, %v790, %v667
      %v800 = vsel %vm798, %v791, %v669
      %v801 = vsel %vm798, %v792, %v671
      %v802 = vsel %vm798, %v793, %v673
      %v803 = vsel %vm798, %v794, %v675
      %v804 = vsel %vm798, %v795, %v677
      %v805 = vsel %vm798, %v796, %v679
      %v806 = vsel %vm798, %v797, %v681
      %vm807 = vcmask 457728
      %v808 = vsel %vm807, %v799, %v699
      %v809 = vsel %vm807, %v800, %v701
      %v810 = vsel %vm807, %v801, %v703
      %v811 = vsel %vm807, %v802, %v705
      %v812 = vsel %vm807, %v803, %v707
      %v813 = vsel %vm807, %v804, %v709
      %v814 = vsel %vm807, %v805, %v711
      %v815 = vsel %vm807, %v806, %v713
      %vm816 = vcmask 523264
      %v817 = vsel %vm816, %v808, %v731
      %v818 = vsel %vm816, %v809, %v733
      %v819 = vsel %vm816, %v810, %v735
      %v820 = vsel %vm816, %v811, %v737
      %v821 = vsel %vm816, %v812, %v739
      %v822 = vsel %vm816, %v813, %v741
      %v823 = vsel %vm816, %v814, %v743
      %v824 = vsel %vm816, %v815, %v745
      %v825 = vpack.c.bf16 %v818, %v817
      %v826 = vpack.c.bf16 %v820, %v819
      %v827 = vpack.c.bf16 %v822, %v821
      %v828 = vpack.c.bf16 %v824, %v823
      %v829 = vld [vmem:[%s2] sm:$0xf]
      %v830 = vld [vmem:[%s2 + $0x4] sm:$0xf]
      %v831 = vld [vmem:[%s2 + $0x8] sm:$0xf]
      %v832 = vld [vmem:[%s2 + $0xc] sm:$0xf]
      %v833 = vld [vmem:[%s2 + $0x10] sm:$0xf]
      %v834 = vld [vmem:[%s2 + $0x14] sm:$0xf]
      %v835 = vld [vmem:[%s2 + $0x18] sm:$0xf]
      %v836 = vld [vmem:[%s2 + $0x1c] sm:$0xf]
      %v837 = vld [vmem:[%s2 + $0x20] sm:$0xf]
      %v847 = vunpack.c.l.b16 %v829
      %v848 = vunpack.c.l.b16 %v830
      %v849 = vunpack.c.l.b16 %v831
      %v850 = vunpack.c.l.b16 %v832
      %v851 = vunpack.c.l.b16 %v833
      %v852 = vunpack.c.l.b16 %v834
      %v853 = vunpack.c.l.b16 %v835
      %v854 = vunpack.c.l.b16 %v836
      %v855 = vunpack.c.l.b16 %v837
      %v856 = vpack.c.b16 %v848, %v847
      %v857 = vpack.c.b16 %v850, %v849
      %v858 = vpack.c.b16 %v852, %v851
      %v859 = vpack.c.b16 %v854, %v853
      %v860 = vpack.c.b16 %v855, %v855
      %vm865 = vcmask 588800
      %v867 = vsel %vm865, %v825, 0
      %v870 = vsel %vm865, %v826, 0
      %v873 = vsel %vm865, %v827, 0
      %v876 = vsel %vm865, %v828, 0
      %vm878 = vcmask 1043456
      %v880 = vsel %vm878, %v860, 0
      %882 = vmatprep.subr.bf16.mxu0 0
      %883 = vmatpush1.bf16.msra.mxu0 %v856
      %884 = vmatprep.subr.bf16.mxu0 0
      %885 = vmatpush1.bf16.msra.mxu0 %v857
      %886 = vmatprep.subr.bf16.mxu0 0
      %887 = vmatpush1.bf16.msra.mxu0 %v858
      %888 = vmatprep.subr.bf16.mxu0 0
      %889 = vmatpush1.bf16.msra.mxu0 %v859
      %890 = vmatprep.subr.bf16.mxu0 0
      %891 = vmatpush1.bf16.msra.mxu0 %v880
      %892 = vmatprep.subr.bf16.mxu0 0
      %893 = vmatpush1.bf16.msra.mxu0 0
      %894 = vmatprep.subr.bf16.mxu0 0
      %895 = vmatpush1.bf16.msra.mxu0 0
      %896 = vmatprep.subr.bf16.mxu0 0
      %897 = vmatpush1.bf16.msra.mxu0 0
      %898 = vmatprep.subr.bf16.mxu0 0
      %899 = vmatpush1.bf16.msra.mxu0 0
      %900 = vmatprep.subr.bf16.mxu0 0
      %901 = vmatpush1.bf16.msra.mxu0 0
      %902 = vmatprep.subr.bf16.mxu0 0
      %903 = vmatpush1.bf16.msra.mxu0 0
      %904 = vmatprep.subr.bf16.mxu0 0
      %905 = vmatpush1.bf16.msra.mxu0 0
      %906 = vmatprep.subr.bf16.mxu0 0
      %907 = vmatpush1.bf16.msra.mxu0 0
      %908 = vmatprep.subr.bf16.mxu0 0
      %909 = vmatpush1.bf16.msra.mxu0 0
      %910 = vmatprep.subr.bf16.mxu0 0
      %911 = vmatpush1.bf16.msra.mxu0 0
      %912 = vmatprep.subr.bf16.mxu0 0
      %913 = vmatpush1.bf16.msra.mxu0 0
      %914 = vmatprep.mubr.bf16.mxu0 0
      %915 = vmatmul.mubr.bf16.gmra.mrb[0].mxu0 %v867
      %v916 = vpop.f32.mrb[0].mxu0
      %v917 = vadd.f32 0.0, %v916
      %v918 = vpop.f32.mrb[0].mxu0
      %v919 = vpop.f32.mrb[0].mxu0
      %v920 = vadd.f32 0.0, %v919
      %v921 = vpop.f32.mrb[0].mxu0
      %922 = vmatprep.mubr.bf16.mxu0 0
      %923 = vmatmul.mubr.bf16.gmra.mrb[0].mxu0 %v870
      %v924 = vpop.f32.mrb[0].mxu0
      %v925 = vadd.f32 0.0, %v924
      %v926 = vpop.f32.mrb[0].mxu0
      %v927 = vpop.f32.mrb[0].mxu0
      %v928 = vadd.f32 0.0, %v927
      %v929 = vpop.f32.mrb[0].mxu0
      %930 = vmatprep.mubr.bf16.mxu0 0
      %931 = vmatmul.mubr.bf16.gmra.mrb[0].mxu0 %v873
      %v932 = vpop.f32.mrb[0].mxu0
      %v933 = vadd.f32 0.0, %v932
      %v934 = vpop.f32.mrb[0].mxu0
      %v935 = vpop.f32.mrb[0].mxu0
      %v936 = vadd.f32 0.0, %v935
      %v937 = vpop.f32.mrb[0].mxu0
      %938 = vmatprep.mubr.bf16.mxu0 0
      %939 = vmatmul.mubr.bf16.gmra.mrb[0].mxu0 %v876
      %v940 = vpop.f32.mrb[0].mxu0
      %v941 = vadd.f32 0.0, %v940
      %v942 = vpop.f32.mrb[0].mxu0
      %v943 = vpop.f32.mrb[0].mxu0
      %v944 = vadd.f32 0.0, %v943
      %v945 = vpop.f32.mrb[0].mxu0
      %946 = vdwg.mxu0
      %947 = vst.msk [vmem:[%s224] sm:$0xff] %vm394, %v917
      %948 = vst.msk [vmem:[%s224 + $0x8] sm:$0xff] %vm394, %v920
      %949 = vst.msk [vmem:[%s224 + $0x10] sm:$0xff] %vm394, %v925
      %950 = vst.msk [vmem:[%s224 + $0x18] sm:$0xff] %vm394, %v928
      %951 = vst.msk [vmem:[%s224 + $0x20] sm:$0xff] %vm394, %v933
      %952 = vst.msk [vmem:[%s224 + $0x28] sm:$0xff] %vm394, %v936
      %953 = vst.msk [vmem:[%s224 + $0x30] sm:$0xff] %vm394, %v941
      %954 = vst.msk [vmem:[%s224 + $0x38] sm:$0xff] %vm394, %v944
      %p955 = scmp.lt.s32.totalorder %s16, 1
      %s956 = scalar_select %p955, %s16, 1
      %s957 = smul.addr %s956, 8
      %s958 = smul.addr %s957, 8
      %s959 = scalar_lea.vmem %s5, %s958
      // Predicated region
      $region41: #{adjust_block_forward.1} parent=39 // pred_check
        %p960 = pneg %p144
      $region42: #{adjust_block_forward.1} parent=39 // pred_check_branch
        %962 = sbr.rel (%p960) target = $region44
      $region43: #{adjust_block_forward.1} parent=39 // pred_region
        _
      $region44: #{adjust_block_forward.1} parent=39 // pred_fallthru
        _
    $region40: #{adjust_block_forward.1} parent=5 // pred_fallthru
      _
    %p963 = scmp.le.s32.totalorder 2, %s11
    // Predicated region
    $region45: #{adjust_block_forward.1} parent=5 // pred_check
      %p964 = pneg %p963
    $region46: #{adjust_block_forward.1} parent=5 // pred_check_branch
      %966 = sbr.rel (%p964) target = $region48
    $region47: #{adjust_block_forward.1} parent=5 // pred_region
      %s967 = ssub.s32 %s11, 2
      // Predicated region
      $region49: #{adjust_block_forward.1} parent=47 // pred_check
        %p968 = pneg %p150
      $region50: #{adjust_block_forward.1} parent=47 // pred_check_branch
        %970 = sbr.rel (%p968) target = $region52
      $region51: #{adjust_block_forward.1} parent=47 // pred_region
        %p971 = scmp.lt.s32.totalorder %s17, 1
        %s972 = scalar_select %p971, %s17, 1
        %s973 = smul.addr %s972, 8
        %s974 = smul.addr %s973, 8
        %s975 = scalar_lea.vmem %s5, %s974
      $region52: #{adjust_block_forward.1} parent=47 // pred_fallthru
        _
    $region48: #{adjust_block_forward.1} parent=5 // pred_fallthru
      _
  $region6: #{adjust_block_forward.1} parent=0 // loop_footer
    %s15 = sadd.s32 1, %s11
  $region7: #{adjust_block_forward.1} parent=0 // loop_footer_branch
    %10 = sbr.rel target = $region3
  $region8: #{adjust_block_forward.1} parent=0 // loop_exit
    _

</llo_original>
